<compile_context>
chip_gen: v6e
topology: v6e:2x2x1
jax: 0.10.0
libtpu: 0.0.40
codegen_flags: <defaults>
</compile_context>

<pallas_src>
import jax
import jax.numpy as jnp
from jax.experimental import pallas as pl
from jax.experimental.pallas import tpu as pltpu


def _mlp_logsoftmax_kernel(x_ref, w1_ref, b1_ref, w2_ref, b2_ref,
                           w3_ref, b3_ref, o_ref):
    # Transposed, batch-on-lanes layout:
    #   x_ref : (n_in, TB)        TB = batch tile, on the 128-lane axis
    #   w*    : PyTorch layout (out_features, in_features), VMEM-resident
    #   b*    : (out_features, 1) -> broadcasts across lanes
    #   o_ref : (n_out, TB)       lane-dense output block
    x = x_ref[...]
    w1 = w1_ref[...]
    b1 = b1_ref[...]
    w2 = w2_ref[...]
    b2 = b2_ref[...]
    w3 = w3_ref[...]
    b3 = b3_ref[...]

    n_in = w1.shape[1]
    n_out = w3.shape[0]

    # ---- Layer 1 + ReLU: contraction dim n_in (=2) is tiny -> skip the MXU,
    # do full-lane-width VPU broadcast FMAs (batch on lanes).
    h1 = b1 + w1[:, 0:1] * x[0:1, :]
    for k in range(1, n_in):                      # static, tiny unroll
        h1 = h1 + w1[:, k:k + 1] * x[k:k + 1, :]
    h1 = jnp.maximum(h1, 0.0)

    # ---- Layer 2 + ReLU: (20,20) x (20,TB) on the MXU.  Batch sits on the
    # N/lane dimension so result tiles are full lane width.
    h2 = jnp.dot(w2, h1, preferred_element_type=jnp.float32) + b2
    h2 = jnp.maximum(h2, 0.0)

    # ---- Layer 3: (n_out,20) x (20,TB) -> logits^T (n_out, TB), lane-dense.
    logits = jnp.dot(w3, h2, preferred_element_type=jnp.float32) + b3

    # ---- LogSoftmax over the feature (sublane) axis, numerically stable.
    if n_out == 2:
        # Explicit two-row elementwise form: no reductions, no concat; exp/log
        # run on the EUP, the rest on the VPU.
        l0 = logits[0:1, :]
        l1 = logits[1:2, :]
        m = jnp.maximum(l0, l1)
        lse = m + jnp.log(jnp.exp(l0 - m) + jnp.exp(l1 - m))
    else:
        m = jnp.max(logits, axis=0, keepdims=True)
        lse = m + jnp.log(jnp.sum(jnp.exp(logits - m), axis=0, keepdims=True))
    o_ref[...] = (logits - lse).astype(o_ref.dtype)


def mlp_forward(x, params, *, tb=16384):
    """MLP + LogSoftmax forward.  x: (batch, n_in) f32 -> (batch, n_out) f32."""
    w1, b1, w2, b2, w3, b3 = params            # PyTorch (out,in) / (out,1) layout
    batch, n_in = x.shape
    n_hidden = w1.shape[0]
    n_out = w3.shape[0]

    # Batch-on-lanes: feed the kernel x^T so the lane axis carries batch.
    xt = x.T                                    # (n_in, batch)

    # Batch tile: large (default 16K rows) to amortize the ~0.35 us grid-step
    # overhead against ~16 B/row of real HBM traffic.  The lane dim must be a
    # multiple of 128 unless it spans the whole batch.  No jnp.pad: a cdiv
    # grid with a masked ragged last block keeps HBM traffic at exactly one
    # read of x and one write of the output.
    if batch <= tb:
        tile = batch
    else:
        tile = max(128, (tb // 128) * 128)
    grid = (pl.cdiv(batch, tile),)

    out_t = pl.pallas_call(
        _mlp_logsoftmax_kernel,
        out_shape=jax.ShapeDtypeStruct((n_out, batch), jnp.float32),
        grid_spec=pltpu.PrefetchScalarGridSpec(
            num_scalar_prefetch=0,
            grid=grid,
            in_specs=[
                pl.BlockSpec((n_in, tile), lambda i: (0, i)),          # x^T tile
                pl.BlockSpec((n_hidden, n_in), lambda i: (0, 0)),      # w1 (resident)
                pl.BlockSpec((n_hidden, 1), lambda i: (0, 0)),         # b1
                pl.BlockSpec((n_hidden, n_hidden), lambda i: (0, 0)),  # w2
                pl.BlockSpec((n_hidden, 1), lambda i: (0, 0)),         # b2
                pl.BlockSpec((n_out, n_hidden), lambda i: (0, 0)),     # w3
                pl.BlockSpec((n_out, 1), lambda i: (0, 0)),            # b3
            ],
            out_specs=pl.BlockSpec((n_out, tile), lambda i: (0, i)),   # lane-dense
        ),
        compiler_params=pltpu.CompilerParams(
            # Megacore sharding on v7x when the grid has >=2 steps; measured
            # no-op on single-TC v5e/v6e.  Explicit VMEM limit so large tiles
            # clear v5e's 16 MiB default scoped VMEM while staying well under
            # v7x's 64 MiB physical VMEM.
            dimension_semantics=("parallel",),
            vmem_limit_bytes=32 * 1024 * 1024,
        ),
    )(xt, w1, b1, w2, b2, w3, b3)

    return out_t.T                              # (batch, n_out)


def init_params(key, n_in=2, n_hidden=20, n_out=2):
    """Deterministic init mimicking nn.Linear's uniform(-1/sqrt(fan_in), ...)."""
    ks = jax.random.split(key, 6)

    def linear(kw, kb, fan_in, fan_out):
        bound = 1.0 / jnp.sqrt(jnp.float32(fan_in))
        # PyTorch layout: weight (out, in); bias stored as a column (out, 1).
        w = jax.random.uniform(kw, (fan_out, fan_in), jnp.float32, -bound, bound)
        b = jax.random.uniform(kb, (fan_out, 1), jnp.float32, -bound, bound)
        return w, b

    w1, b1 = linear(ks[0], ks[1], n_in, n_hidden)
    w2, b2 = linear(ks[2], ks[3], n_hidden, n_hidden)
    w3, b3 = linear(ks[4], ks[5], n_hidden, n_out)
    return (w1, b1, w2, b2, w3, b3)


def reference_forward(x, params):
    """Pure-JAX reference for correctness checking."""
    w1, b1, w2, b2, w3, b3 = params
    h = jnp.maximum(x @ w1.T + b1[:, 0], 0.0)
    h = jnp.maximum(h @ w2.T + b2[:, 0], 0.0)
    logits = h @ w3.T + b3[:, 0]
    return jax.nn.log_softmax(logits, axis=1)


if __name__ == "__main__":
    key = jax.random.PRNGKey(0)
    k_p, k_x, k_x2 = jax.random.split(key, 3)

    n_in, n_hidden, n_out = 2, 20, 2
    params = init_params(k_p, n_in, n_hidden, n_out)

    # Small case matching the module defaults (single grid step).
    batch = 8
    x = jax.random.normal(k_x, (batch, n_in), dtype=jnp.float32)
    out = jax.block_until_ready(mlp_forward(x, params))
    ref = reference_forward(x, params)
    assert out.shape == (batch, n_out)
    assert jnp.allclose(out, ref, atol=1e-5, rtol=1e-5), "mismatch vs reference (batch=8)"

    # Non-tile-multiple batch with a small tile to exercise the cdiv grid and
    # the masked ragged last block (no jnp.pad anywhere).
    batch2 = 300
    x2 = jax.random.normal(k_x2, (batch2, n_in), dtype=jnp.float32)
    out2 = jax.block_until_ready(mlp_forward(x2, params, tb=128))
    ref2 = reference_forward(x2, params)
    assert out2.shape == (batch2, n_out)
    assert jnp.allclose(out2, ref2, atol=1e-5, rtol=1e-5), "mismatch vs reference (batch=300)"

    print("KERNEL_OK")
</pallas_src>

<mosaic_0001>
module attributes {stable_mosaic.version = 11 : i64} {
  func.func @_mlp_logsoftmax_kernel(%arg0: i32, %arg1: memref<2x8xf32, #tpu.memory_space<vmem>>, %arg2: memref<20x2xf32, #tpu.memory_space<vmem>>, %arg3: memref<20x1xf32, #tpu.memory_space<vmem>>, %arg4: memref<20x20xf32, #tpu.memory_space<vmem>>, %arg5: memref<20x1xf32, #tpu.memory_space<vmem>>, %arg6: memref<2x20xf32, #tpu.memory_space<vmem>>, %arg7: memref<2x1xf32, #tpu.memory_space<vmem>>, %arg8: memref<2x8xf32, #tpu.memory_space<vmem>>) attributes {dimension_semantics = [#tpu.dimension_semantics<parallel>], iteration_bounds = array<i64: 1>, scalar_prefetch = 0 : i64, scratch_operands = 0 : i64, tpu.core_type = #tpu.core_type<tc>, window_params = [{transform_indices = @transform_0, window_bounds = array<i64: 2, 8>}, {pipeline_mode = #tpu.pipeline_mode<synchronous>, transform_indices = @transform_1, window_bounds = array<i64: 20, 2>}, {pipeline_mode = #tpu.pipeline_mode<synchronous>, transform_indices = @transform_2, window_bounds = array<i64: 20, 1>}, {pipeline_mode = #tpu.pipeline_mode<synchronous>, transform_indices = @transform_3, window_bounds = array<i64: 20, 20>}, {pipeline_mode = #tpu.pipeline_mode<synchronous>, transform_indices = @transform_4, window_bounds = array<i64: 20, 1>}, {pipeline_mode = #tpu.pipeline_mode<synchronous>, transform_indices = @transform_5, window_bounds = array<i64: 2, 20>}, {pipeline_mode = #tpu.pipeline_mode<synchronous>, transform_indices = @transform_6, window_bounds = array<i64: 2, 1>}, {transform_indices = @transform_7, window_bounds = array<i64: 2, 8>}]} {
    %c0 = arith.constant 0 : index
    %c0_0 = arith.constant 0 : index
    %0 = vector.load %arg1[%c0, %c0_0] : memref<2x8xf32, #tpu.memory_space<vmem>>, vector<2x8xf32>
    %c0_1 = arith.constant 0 : index
    %c0_2 = arith.constant 0 : index
    %1 = vector.load %arg2[%c0_1, %c0_2] : memref<20x2xf32, #tpu.memory_space<vmem>>, vector<20x2xf32>
    %c0_3 = arith.constant 0 : index
    %c0_4 = arith.constant 0 : index
    %2 = vector.load %arg3[%c0_3, %c0_4] : memref<20x1xf32, #tpu.memory_space<vmem>>, vector<20x1xf32>
    %c0_5 = arith.constant 0 : index
    %c0_6 = arith.constant 0 : index
    %3 = vector.load %arg4[%c0_5, %c0_6] : memref<20x20xf32, #tpu.memory_space<vmem>>, vector<20x20xf32>
    %c0_7 = arith.constant 0 : index
    %c0_8 = arith.constant 0 : index
    %4 = vector.load %arg5[%c0_7, %c0_8] : memref<20x1xf32, #tpu.memory_space<vmem>>, vector<20x1xf32>
    %c0_9 = arith.constant 0 : index
    %c0_10 = arith.constant 0 : index
    %5 = vector.load %arg6[%c0_9, %c0_10] : memref<2x20xf32, #tpu.memory_space<vmem>>, vector<2x20xf32>
    %c0_11 = arith.constant 0 : index
    %c0_12 = arith.constant 0 : index
    %6 = vector.load %arg7[%c0_11, %c0_12] : memref<2x1xf32, #tpu.memory_space<vmem>>, vector<2x1xf32>
    %7 = vector.extract_strided_slice %1 {offsets = [0, 0], sizes = [20, 1], strides = [1, 1]} : vector<20x2xf32> to vector<20x1xf32>
    %8 = vector.extract_strided_slice %0 {offsets = [0, 0], sizes = [1, 8], strides = [1, 1]} : vector<2x8xf32> to vector<1x8xf32>
    %9 = vector.broadcast %7 : vector<20x1xf32> to vector<20x8xf32>
    %10 = vector.broadcast %8 : vector<1x8xf32> to vector<20x8xf32>
    %11 = arith.mulf %9, %10 : vector<20x8xf32>
    %12 = vector.broadcast %2 : vector<20x1xf32> to vector<20x8xf32>
    %13 = arith.addf %12, %11 : vector<20x8xf32>
    %14 = vector.extract_strided_slice %1 {offsets = [0, 1], sizes = [20, 1], strides = [1, 1]} : vector<20x2xf32> to vector<20x1xf32>
    %15 = vector.extract_strided_slice %0 {offsets = [1, 0], sizes = [1, 8], strides = [1, 1]} : vector<2x8xf32> to vector<1x8xf32>
    %16 = vector.broadcast %14 : vector<20x1xf32> to vector<20x8xf32>
    %17 = vector.broadcast %15 : vector<1x8xf32> to vector<20x8xf32>
    %18 = arith.mulf %16, %17 : vector<20x8xf32>
    %19 = arith.addf %13, %18 : vector<20x8xf32>
    %cst = arith.constant 0.000000e+00 : f32
    %20 = vector.broadcast %cst : f32 to vector<20x8xf32>
    %21 = arith.maximumf %19, %20 : vector<20x8xf32>
    %cst_13 = arith.constant dense<0.000000e+00> : vector<20x8xf32>
    %22 = tpu.matmul %3, %21, %cst_13 {dimension_numbers = #tpu.dot_dimension_numbers<[1], [0], [0], [1], [0, 0, 1, 1], [], []>} : vector<20x20xf32>, vector<20x8xf32>, vector<20x8xf32> -> vector<20x8xf32>
    %23 = vector.broadcast %4 : vector<20x1xf32> to vector<20x8xf32>
    %24 = arith.addf %22, %23 : vector<20x8xf32>
    %cst_14 = arith.constant 0.000000e+00 : f32
    %25 = vector.broadcast %cst_14 : f32 to vector<20x8xf32>
    %26 = arith.maximumf %24, %25 : vector<20x8xf32>
    %cst_15 = arith.constant dense<0.000000e+00> : vector<2x8xf32>
    %27 = tpu.matmul %5, %26, %cst_15 {dimension_numbers = #tpu.dot_dimension_numbers<[1], [0], [0], [1], [0, 0, 1, 1], [], []>} : vector<2x20xf32>, vector<20x8xf32>, vector<2x8xf32> -> vector<2x8xf32>
    %28 = vector.broadcast %6 : vector<2x1xf32> to vector<2x8xf32>
    %29 = arith.addf %27, %28 : vector<2x8xf32>
    %30 = vector.extract_strided_slice %29 {offsets = [0, 0], sizes = [1, 8], strides = [1, 1]} : vector<2x8xf32> to vector<1x8xf32>
    %31 = vector.extract_strided_slice %29 {offsets = [1, 0], sizes = [1, 8], strides = [1, 1]} : vector<2x8xf32> to vector<1x8xf32>
    %32 = arith.maximumf %30, %31 : vector<1x8xf32>
    %33 = arith.subf %30, %32 : vector<1x8xf32>
    %34 = math.exp %33 : vector<1x8xf32>
    %35 = arith.subf %31, %32 : vector<1x8xf32>
    %36 = math.exp %35 : vector<1x8xf32>
    %37 = arith.addf %34, %36 : vector<1x8xf32>
    %38 = math.log %37 : vector<1x8xf32>
    %39 = arith.addf %32, %38 : vector<1x8xf32>
    %40 = vector.broadcast %39 : vector<1x8xf32> to vector<2x8xf32>
    %41 = arith.subf %29, %40 : vector<2x8xf32>
    %c0_16 = arith.constant 0 : index
    %c0_17 = arith.constant 0 : index
    %42 = vector.load %arg8[%c0_16, %c0_17] : memref<2x8xf32, #tpu.memory_space<vmem>>, vector<2x8xf32>
    tpu.vector_store %arg8[%c0_16, %c0_17], %41 {strides = array<i32>} : memref<2x8xf32, #tpu.memory_space<vmem>>, vector<2x8xf32>,
    return
  }
  func.func @transform_0(%arg0: i32) -> (i32, i32) {
    %c0_i32 = arith.constant 0 : i32
    %c0_i32_0 = arith.constant 0 : i32
    return %c0_i32, %arg0 : i32, i32
  }
  func.func @transform_1(%arg0: i32) -> (i32, i32) {
    %c0_i32 = arith.constant 0 : i32
    %c0_i32_0 = arith.constant 0 : i32
    %c0_i32_1 = arith.constant 0 : i32
    return %c0_i32, %c0_i32_0 : i32, i32
  }
  func.func @transform_2(%arg0: i32) -> (i32, i32) {
    %c0_i32 = arith.constant 0 : i32
    %c0_i32_0 = arith.constant 0 : i32
    %c0_i32_1 = arith.constant 0 : i32
    return %c0_i32, %c0_i32_0 : i32, i32
  }
  func.func @transform_3(%arg0: i32) -> (i32, i32) {
    %c0_i32 = arith.constant 0 : i32
    %c0_i32_0 = arith.constant 0 : i32
    %c0_i32_1 = arith.constant 0 : i32
    return %c0_i32, %c0_i32_0 : i32, i32
  }
  func.func @transform_4(%arg0: i32) -> (i32, i32) {
    %c0_i32 = arith.constant 0 : i32
    %c0_i32_0 = arith.constant 0 : i32
    %c0_i32_1 = arith.constant 0 : i32
    return %c0_i32, %c0_i32_0 : i32, i32
  }
  func.func @transform_5(%arg0: i32) -> (i32, i32) {
    %c0_i32 = arith.constant 0 : i32
    %c0_i32_0 = arith.constant 0 : i32
    %c0_i32_1 = arith.constant 0 : i32
    return %c0_i32, %c0_i32_0 : i32, i32
  }
  func.func @transform_6(%arg0: i32) -> (i32, i32) {
    %c0_i32 = arith.constant 0 : i32
    %c0_i32_0 = arith.constant 0 : i32
    %c0_i32_1 = arith.constant 0 : i32
    return %c0_i32, %c0_i32_0 : i32, i32
  }
  func.func @transform_7(%arg0: i32) -> (i32, i32) {
    %c0_i32 = arith.constant 0 : i32
    %c0_i32_0 = arith.constant 0 : i32
    return %c0_i32, %arg0 : i32, i32
  }
}

</mosaic_0001>

<llo_original>
// kernel: tpu_custom_call.1
$region0: #{tpu_custom_call.1}
  #allocation0 [shape = 'u32[]', space=smem, size = 0x4, offset = 0x4, fixed_abs, tag = 'smem constant byte address 0x4 - core index']
  #allocation1 [shape = 'u32[144,128]{1,0:T(1,128)}', space=vmem, size = 0x12000, scoped, tag = 'internal scratch']
  %s0 = inlined_call_operand.vmem [shape: f32[2,8], index: 0, kind: input, shape index: {}]
  %s1 = inlined_call_operand.vmem [shape: f32[20,2], index: 1, kind: input, shape index: {}]
  %s2 = inlined_call_operand.vmem [shape: f32[20,1], index: 2, kind: input, shape index: {}]
  %s3 = inlined_call_operand.vmem [shape: f32[20,20], index: 3, kind: input, shape index: {}]
  %s4 = inlined_call_operand.vmem [shape: f32[20,1], index: 4, kind: input, shape index: {}]
  %s5 = inlined_call_operand.vmem [shape: f32[2,20], index: 5, kind: input, shape index: {}]
  %s6 = inlined_call_operand.vmem [shape: f32[2,1], index: 6, kind: input, shape index: {}]
  %s7 = inlined_call_operand.hbm [shape: f32[2,8], index: 7, kind: output, shape index: {}]
  %s8 = sld [smem:[#allocation0]]
  $region38: #{tpu_custom_call.1} parent=0
    _
  %s10 = ssub.s32 1, %s8
  %s11 = scalar_select 0, %s10, %s8
  $region1: #{tpu_custom_call.1} parent=0
    #allocation2 [shape = 'u8[1024]{0}', space=vmem, size = 0x400, scoped, tag = 'output window, operand 0, single buffered']
    #allocation3 [shape = 's32[1]{0}', space=sflag, size = 0x4, scoped, tag = 'scoped memory for tpu_custom_call.1']
    %12 = vsyncpa [#allocation3], 0
    // Predicated region
    $region2: #{tpu_custom_call.1} parent=1 // pred_check
      _
    $region3: #{tpu_custom_call.1} parent=1 // pred_check_branch
      %14 = sbr.rel (0) target = $region5
    $region4: #{tpu_custom_call.1} parent=1 // pred_region
      _
    $region5: #{tpu_custom_call.1} parent=1 // pred_fallthru
      _
    // Predicated region
    $region6: #{tpu_custom_call.1} parent=1 // pred_check
      _
    $region7: #{tpu_custom_call.1} parent=1 // pred_check_branch
      %16 = sbr.rel (0) target = $region9
    $region8: #{tpu_custom_call.1} parent=1 // pred_region
      _
    $region9: #{tpu_custom_call.1} parent=1 // pred_fallthru
      _
    // Predicated region
    $region10: #{tpu_custom_call.1} parent=1 // pred_check
      _
    $region11: #{tpu_custom_call.1} parent=1 // pred_check_branch
      %18 = sbr.rel (0) target = $region13
    $region12: #{tpu_custom_call.1} parent=1 // pred_region
      _
    $region13: #{tpu_custom_call.1} parent=1 // pred_fallthru
      _
    // Predicated region
    $region14: #{tpu_custom_call.1} parent=1 // pred_check
      _
    $region15: #{tpu_custom_call.1} parent=1 // pred_check_branch
      %20 = sbr.rel (0) target = $region17
    $region16: #{tpu_custom_call.1} parent=1 // pred_region
      _
    $region17: #{tpu_custom_call.1} parent=1 // pred_fallthru
      _
    // Predicated region
    $region18: #{tpu_custom_call.1} parent=1 // pred_check
      _
    $region19: #{tpu_custom_call.1} parent=1 // pred_check_branch
      %22 = sbr.rel (0) target = $region21
    $region20: #{tpu_custom_call.1} parent=1 // pred_region
      _
    $region21: #{tpu_custom_call.1} parent=1 // pred_fallthru
      _
    // Predicated region
    $region22: #{tpu_custom_call.1} parent=1 // pred_check
      _
    $region23: #{tpu_custom_call.1} parent=1 // pred_check_branch
      %24 = sbr.rel (0) target = $region25
    $region24: #{tpu_custom_call.1} parent=1 // pred_region
      _
    $region25: #{tpu_custom_call.1} parent=1 // pred_fallthru
      _
    // Predicated region
    $region26: #{tpu_custom_call.1} parent=1 // pred_check
      _
    $region27: #{tpu_custom_call.1} parent=1 // pred_check_branch
      %26 = sbr.rel (0) target = $region29
    $region28: #{tpu_custom_call.1} parent=1 // pred_region
      _
    $region29: #{tpu_custom_call.1} parent=1 // pred_fallthru
      _
    %v27 = vld [vmem:[%s0] sm:$0x3]
    %v28 = vld [vmem:[%s1] sm:$0xff]
    %v29 = vld [vmem:[%s1 + $0x8] sm:$0xff]
    %v30 = vld [vmem:[%s1 + $0x10] sm:$0xf]
    %v31 = vld [vmem:[%s2] sm:$0xff]
    %v32 = vld [vmem:[%s2 + $0x8] sm:$0xff]
    %v33 = vld [vmem:[%s2 + $0x10] sm:$0xf]
    %v34 = vld [vmem:[%s3] sm:$0xff]
    %v35 = vld [vmem:[%s3 + $0x8] sm:$0xff]
    %v36 = vld [vmem:[%s3 + $0x10] sm:$0xf]
    %v37 = vld [vmem:[%s4] sm:$0xff]
    %v38 = vld [vmem:[%s4 + $0x8] sm:$0xff]
    %v39 = vld [vmem:[%s4 + $0x10] sm:$0xf]
    %v40 = vld [vmem:[%s5] sm:$0x3]
    %v41 = vld [vmem:[%s6] sm:$0x3]
    %43 = vset.pattern.permute.xlu0 0
    %44 = vperm.xlu0 %43, %v28
    %v45 = vpop.permute.xlu0 %44
    %48 = vset.pattern.permute.xlu0 0
    %49 = vperm.xlu0 %48, %v29
    %v50 = vpop.permute.xlu0 %49
    %53 = vset.pattern.permute.xlu0 0
    %54 = vperm.xlu0 %53, %v30
    %v55 = vpop.permute.xlu0 %54
    %v57 = vlaneseq
    %v58 = vshrl.u32 %v57, 7
    %v59 = vsub.s32 0, %v58
    %v60 = vrot.slane %v27, %v59
    %v61 = vmul.f32 %v45, %v60
    %v62 = vmul.f32 %v50, %v60
    %v63 = vmul.f32 %v55, %v60
    %65 = vset.pattern.permute.xlu0 0
    %66 = vperm.xlu0 %65, %v31
    %v67 = vpop.permute.xlu0 %66
    %70 = vset.pattern.permute.xlu0 0
    %71 = vperm.xlu0 %70, %v32
    %v72 = vpop.permute.xlu0 %71
    %75 = vset.pattern.permute.xlu0 0
    %76 = vperm.xlu0 %75, %v33
    %v77 = vpop.permute.xlu0 %76
    %v79 = vadd.f32 %v67, %v61
    %v80 = vadd.f32 %v72, %v62
    %v81 = vadd.f32 %v77, %v63
    %82 = vset.pattern.permute.xlu0 1
    %83 = vperm.xlu0 %82, %v28
    %v84 = vpop.permute.xlu0 %83
    %86 = vset.pattern.permute.xlu0 1
    %87 = vperm.xlu0 %86, %v29
    %v88 = vpop.permute.xlu0 %87
    %90 = vset.pattern.permute.xlu0 1
    %91 = vperm.xlu0 %90, %v30
    %v92 = vpop.permute.xlu0 %91
    %v94 = vlaneseq
    %v95 = vshrl.u32 %v94, 7
    %v96 = vsub.s32 1, %v95
    %v97 = vrot.slane %v27, %v96
    %v98 = vmul.f32 %v84, %v97
    %v99 = vmul.f32 %v88, %v97
    %v100 = vmul.f32 %v92, %v97
    %v101 = vadd.f32 %v79, %v98
    %v102 = vadd.f32 %v80, %v99
    %v103 = vadd.f32 %v81, %v100
    %v104 = vmax.f32 %v101, 0.0
    %v105 = vmax.f32 %v102, 0.0
    %v106 = vmax.f32 %v103, 0.0
    %108 = vset.pattern.permute.xlu0 0
    %109 = vperm.xlu0 %108, %v37
    %v110 = vpop.permute.xlu0 %109
    %113 = vset.pattern.permute.xlu0 0
    %114 = vperm.xlu0 %113, %v38
    %v115 = vpop.permute.xlu0 %114
    %118 = vset.pattern.permute.xlu0 0
    %119 = vperm.xlu0 %118, %v39
    %v120 = vpop.permute.xlu0 %119
    %vm122 = vcmask 162816
    %v124 = vsel %vm122, %v34, 0
    %v127 = vsel %vm122, %v35, 0
    %v130 = vsel %vm122, %v36, 0
    %vm132 = vcmask 1043456
    %v134 = vsel %vm132, %v106, 0
    %136 = vmatprep.subr.mxu0 0.0
    %137 = vmatpush1.msra.mxu0 0.0
    %138 = vmatprep.subr.mxu0 0.0
    %139 = vmatpush1.msra.mxu0 0.0
    %140 = vmatprep.subr.mxu0 0.0
    %141 = vmatpush1.msra.mxu0 0.0
    %142 = vmatprep.subr.mxu0 0.0
    %143 = vmatpush1.msra.mxu0 0.0
    %144 = vmatprep.subr.mxu0 0.0
    %145 = vmatpush1.msra.mxu0 0.0
    %146 = vmatprep.subr.mxu0 0.0
    %147 = vmatpush1.msra.mxu0 0.0
    %148 = vmatprep.subr.mxu0 0.0
    %149 = vmatpush1.msra.mxu0 0.0
    %150 = vmatprep.subr.mxu0 0.0
    %151 = vmatpush1.msra.mxu0 0.0
    %152 = vmatprep.subr.mxu0 0.0
    %153 = vmatpush1.msra.mxu0 0.0
    %154 = vmatprep.subr.mxu0 0.0
    %155 = vmatpush1.msra.mxu0 0.0
    %156 = vmatprep.subr.mxu0 0.0
    %157 = vmatpush1.msra.mxu0 0.0
    %158 = vmatprep.subr.mxu0 0.0
    %159 = vmatpush1.msra.mxu0 0.0
    %160 = vmatprep.subr.mxu0 0.0
    %161 = vmatpush1.msra.mxu0 0.0
    %162 = vmatprep.subr.mxu0 0.0
    %163 = vmatpush1.msra.mxu0 %v134
    %164 = vmatprep.subr.mxu0 0.0
    %165 = vmatpush1.msra.mxu0 %v105
    %166 = vmatprep.subr.mxu0 0.0
    %167 = vmatpush1.msra.mxu0 %v104
    %168 = vmatprep.subr.mxu0 0.0
    %169 = vmatpush2.msra.mxu0 0.0
    %170 = vmatprep.subr.mxu0 0.0
    %171 = vmatpush2.msra.mxu0 0.0
    %172 = vmatprep.subr.mxu0 0.0
    %173 = vmatpush2.msra.mxu0 0.0
    %174 = vmatprep.subr.mxu0 0.0
    %175 = vmatpush2.msra.mxu0 0.0
    %176 = vmatprep.subr.mxu0 0.0
    %177 = vmatpush2.msra.mxu0 0.0
    %178 = vmatprep.subr.mxu0 0.0
    %179 = vmatpush2.msra.mxu0 0.0
    %180 = vmatprep.subr.mxu0 0.0
    %181 = vmatpush2.msra.mxu0 0.0
    %182 = vmatprep.subr.mxu0 0.0
    %183 = vmatpush2.msra.mxu0 0.0
    %184 = vmatprep.subr.mxu0 0.0
    %185 = vmatpush2.msra.mxu0 0.0
    %186 = vmatprep.subr.mxu0 0.0
    %187 = vmatpush2.msra.mxu0 0.0
    %188 = vmatprep.subr.mxu0 0.0
    %189 = vmatpush2.msra.mxu0 0.0
    %190 = vmatprep.subr.mxu0 0.0
    %191 = vmatpush2.msra.mxu0 0.0
    %192 = vmatprep.subr.mxu0 0.0
    %193 = vmatpush2.msra.mxu0 0.0
    %194 = vmatprep.subr.mxu0 0.0
    %195 = vmatpush2.msra.mxu0 0.0
    %196 = vmatprep.subr.mxu0 0.0
    %197 = vmatpush2.msra.mxu0 0.0
    %198 = vmatprep.subr.mxu0 0.0
    %199 = vmatpush2.msra.mxu0 0.0
    %200 = vmatprep.mubr.f32.mxu0 0.0
    %201 = vmatmul.mubr.f32.gmra.mxu0 %v124
    %v202 = vpop.f32.mrf.mxu0
    %v203 = vadd.f32 %v110, %v202
    %v204 = vpop.f32.mrf.mxu0
    %205 = vmatprep.mubr.f32.mxu0 0.0
    %206 = vmatmul.mubr.f32.gmra.mxu0 %v127
    %v207 = vpop.f32.mrf.mxu0
    %v208 = vadd.f32 %v115, %v207
    %v209 = vpop.f32.mrf.mxu0
    %210 = vmatprep.mubr.f32.mxu0 0.0
    %211 = vmatmul.mubr.f32.gmra.mxu0 %v130
    %v212 = vpop.f32.mrf.mxu0
    %v213 = vadd.f32 %v120, %v212
    %v214 = vpop.f32.mrf.mxu0
    %215 = vdwg.mxu0
    %v216 = vmax.f32 %v203, 0.0
    %v217 = vmax.f32 %v208, 0.0
    %v218 = vmax.f32 %v213, 0.0
    %220 = vset.pattern.permute.xlu0 0
    %221 = vperm.xlu0 %220, %v41
    %v222 = vpop.permute.xlu0 %221
    %v225 = vsel %vm122, %v40, 0
    %v228 = vsel %vm132, %v218, 0
    %230 = vmatprep.subr.mxu0 0.0
    %231 = vmatpush1.msra.mxu0 0.0
    %232 = vmatprep.subr.mxu0 0.0
    %233 = vmatpush1.msra.mxu0 0.0
    %234 = vmatprep.subr.mxu0 0.0
    %235 = vmatpush1.msra.mxu0 0.0
    %236 = vmatprep.subr.mxu0 0.0
    %237 = vmatpush1.msra.mxu0 0.0
    %238 = vmatprep.subr.mxu0 0.0
    %239 = vmatpush1.msra.mxu0 0.0
    %240 = vmatprep.subr.mxu0 0.0
    %241 = vmatpush1.msra.mxu0 0.0
    %242 = vmatprep.subr.mxu0 0.0
    %243 = vmatpush1.msra.mxu0 0.0
    %244 = vmatprep.subr.mxu0 0.0
    %245 = vmatpush1.msra.mxu0 0.0
    %246 = vmatprep.subr.mxu0 0.0
    %247 = vmatpush1.msra.mxu0 0.0
    %248 = vmatprep.subr.mxu0 0.0
    %249 = vmatpush1.msra.mxu0 0.0
    %250 = vmatprep.subr.mxu0 0.0
    %251 = vmatpush1.msra.mxu0 0.0
    %252 = vmatprep.subr.mxu0 0.0
    %253 = vmatpush1.msra.mxu0 0.0
    %254 = vmatprep.subr.mxu0 0.0
    %255 = vmatpush1.msra.mxu0 0.0
    %256 = vmatprep.subr.mxu0 0.0
    %257 = vmatpush1.msra.mxu0 %v228
    %258 = vmatprep.subr.mxu0 0.0
    %259 = vmatpush1.msra.mxu0 %v217
    %260 = vmatprep.subr.mxu0 0.0
    %261 = vmatpush1.msra.mxu0 %v216
    %262 = vmatprep.subr.mxu0 0.0
    %263 = vmatpush2.msra.mxu0 0.0
    %264 = vmatprep.subr.mxu0 0.0
    %265 = vmatpush2.msra.mxu0 0.0
    %266 = vmatprep.subr.mxu0 0.0
    %267 = vmatpush2.msra.mxu0 0.0
    %268 = vmatprep.subr.mxu0 0.0
    %269 = vmatpush2.msra.mxu0 0.0
    %270 = vmatprep.subr.mxu0 0.0
    %271 = vmatpush2.msra.mxu0 0.0
    %272 = vmatprep.subr.mxu0 0.0
    %273 = vmatpush2.msra.mxu0 0.0
    %274 = vmatprep.subr.mxu0 0.0
    %275 = vmatpush2.msra.mxu0 0.0
    %276 = vmatprep.subr.mxu0 0.0
    %277 = vmatpush2.msra.mxu0 0.0
    %278 = vmatprep.subr.mxu0 0.0
    %279 = vmatpush2.msra.mxu0 0.0
    %280 = vmatprep.subr.mxu0 0.0
    %281 = vmatpush2.msra.mxu0 0.0
    %282 = vmatprep.subr.mxu0 0.0
    %283 = vmatpush2.msra.mxu0 0.0
    %284 = vmatprep.subr.mxu0 0.0
    %285 = vmatpush2.msra.mxu0 0.0
    %286 = vmatprep.subr.mxu0 0.0
    %287 = vmatpush2.msra.mxu0 0.0
    %288 = vmatprep.subr.mxu0 0.0
    %289 = vmatpush2.msra.mxu0 0.0
    %290 = vmatprep.subr.mxu0 0.0
    %291 = vmatpush2.msra.mxu0 0.0
    %292 = vmatprep.subr.mxu0 0.0
    %293 = vmatpush2.msra.mxu0 0.0
    %294 = vmatprep.mubr.f32.mxu0 0.0
    %295 = vmatmul.mubr.f32.gmra.mxu0 %v225
    %v296 = vpop.f32.mrf.mxu0
    %v297 = vadd.f32 %v222, %v296
    %v298 = vpop.f32.mrf.mxu0
    %299 = vdwg.mxu0
    %v301 = vrot.slane %v297, 1
    %v303 = vmax.f32 %v297, %v301
    %v304 = vsub.f32 %v297, %v303
    %v305 = vmul.f32 %v304, 1.442695
    %v306 = vpow.pop %v305
    %v308 = vrot.slane %v303, 7
    %v310 = vsub.f32 %v297, %v308
    %v311 = vmul.f32 %v310, 1.442695
    %v312 = vpow.pop %v311
    %v314 = vrot.slane %v312, 1
    %v316 = vadd.f32 %v306, %v314
    %v317 = vlog2.pop %v316
    %v318 = vmul.f32 %v317, 0.6931472
    %v319 = vadd.f32 %v303, %v318
    %v320 = vlaneseq
    %v321 = vshrl.u32 %v320, 7
    %v322 = vsub.s32 0, %v321
    %v323 = vrot.slane %v319, %v322
    %v324 = vsub.f32 %v297, %v323
    %vm325 = vcmask 58368
    %326 = vst.msk [vmem:[#allocation2] sm:$0x3] %vm325, %v324
    // Predicated region
    $region30: #{tpu_custom_call.1} parent=1 // pred_check
      _
    $region31: #{tpu_custom_call.1} parent=1 // pred_check_branch
      %328 = sbr.rel (0) target = $region33
    $region32: #{tpu_custom_call.1} parent=1 // pred_region
      %s330 = ssub.s32 32, 32
      %331 = vsyncadd [#allocation3], %s330
      %s333 = sshll.u32 [#allocation2], 4
      %s334 = int_to_ptr.vmem [resolvable:$true] %s333
      %336 = dma.vmem_to_hbm [thread:$0]  %s334, 32, %s7, [#allocation3]
    $region33: #{tpu_custom_call.1} parent=1 // pred_fallthru
      _
    // Predicated region
    $region34: #{tpu_custom_call.1} parent=1 // pred_check
      _
    $region35: #{tpu_custom_call.1} parent=1 // pred_check_branch
      %338 = sbr.rel (0) target = $region37
    $region36: #{tpu_custom_call.1} parent=1 // pred_region
      %339 = dma.done [#allocation3], 32
    $region37: #{tpu_custom_call.1} parent=1 // pred_fallthru
      _
    %340 = vsyncpa [#allocation3], 1

</llo_original>
